<compile_context>
chip_gen: v7x
topology: tpu7x:2x2x1
jax: 0.10.0
libtpu: 0.0.40
codegen_flags: <defaults>
</compile_context>

<pallas_src>
import jax
import jax.numpy as jnp
from jax.experimental import pallas as pl
from jax.experimental.pallas import tpu as pltpu


_LANE = 128
_SUBLANE = 8
_MAX_ROW_TILE = 256                      # multiple of 8/16/32 -> clean packing
_VMEM_BUDGET = 24 * 1024 * 1024          # block budget (x + out dbl-buffered + gamma)
_VMEM_LIMIT = 32 * 1024 * 1024           # explicit scoped-VMEM limit, safe on v5e/v6e/v7x
_MIN_BLOCKS_BYTES = 4 * 1024 * 1024      # slabs bigger than this get >= _MIN_BLOCKS
_MIN_BLOCKS = 4                          # keep both v7x TCs fed + pipelined DMA


def _round_up(x: int, m: int) -> int:
    return (x + m - 1) // m * m


def _scale_kernel(x_ref, g_ref, o_ref):
    # x_ref: (TR, TL) activation block.
    # g_ref: (TR, 1)  per-row gamma (primary path)  or  (1, TL) per-lane gamma
    #        (fallback path); jnp broadcasting handles both.
    o_ref[...] = (x_ref[...].astype(jnp.float32) * g_ref[...]).astype(o_ref.dtype)


def _pick_tiles(n_rows: int, n_lanes: int, itemsize: int, per_lane_gamma: bool):
    """Pick (row_tile, lane_tile) for an (n_rows, n_lanes) elementwise slab.

    per_lane_gamma=False: gamma block is (TR, 1)  -> pads to (TR, 128) f32 (fixed).
    per_lane_gamma=True : gamma block is (1, TL)  -> pads to (8, TL)  f32 (scales w/ TL).
    """
    tr = n_rows if n_rows <= _MAX_ROW_TILE else _MAX_ROW_TILE
    tr_pad = _round_up(tr, _SUBLANE)                 # VMEM sublane padding

    # bytes per unit of lane-tile: x + out, each double-buffered
    per_lane = 4 * tr_pad * itemsize
    fixed = 0
    if per_lane_gamma:
        per_lane += 2 * _SUBLANE * 4                 # (8, TL) f32, double-buffered
    else:
        fixed = 2 * tr_pad * _LANE * 4               # (TR, 128) f32, double-buffered

    tl = (_VMEM_BUDGET - fixed) // per_lane
    tl = max(_LANE, tl // _LANE * _LANE)
    if n_lanes <= tl:
        tl = n_lanes                                 # one block covers the full lane axis

    # Degenerate-grid guard: on non-trivial slabs keep >= _MIN_BLOCKS blocks so
    # dimension_semantics=("parallel","parallel") can shard across v7x's two
    # TensorCores and the pipeline has something to overlap.
    total_bytes = n_rows * n_lanes * itemsize
    if total_bytes > _MIN_BLOCKS_BYTES:
        def nblocks(tr_, tl_):
            return pl.cdiv(n_rows, tr_) * pl.cdiv(n_lanes, tl_)

        while nblocks(tr, tl) < _MIN_BLOCKS and tl > _LANE:
            tl = max(_LANE, _round_up(tl // 2, _LANE))
        while nblocks(tr, tl) < _MIN_BLOCKS and tr > _SUBLANE:
            tr = max(_SUBLANE, _round_up(tr // 2, _SUBLANE))

    return tr, tl


def _scale_rows(x2d: jax.Array, g_col: jax.Array) -> jax.Array:
    """Primary path: x2d (N*C, HW), g_col (N*C, 1) f32 per-row scale."""
    R, L = x2d.shape
    TR, TL = _pick_tiles(R, L, x2d.dtype.itemsize, per_lane_gamma=False)
    grid = (pl.cdiv(R, TR), pl.cdiv(L, TL))          # rows outer -> gamma block
    return pl.pallas_call(                           # constant over inner lane loop
        _scale_kernel,
        out_shape=jax.ShapeDtypeStruct((R, L), x2d.dtype),
        grid_spec=pltpu.PrefetchScalarGridSpec(
            num_scalar_prefetch=0,
            grid=grid,
            in_specs=[
                pl.BlockSpec((TR, TL), lambda i, j: (i, j)),
                pl.BlockSpec((TR, 1), lambda i, j: (i, 0)),
            ],
            out_specs=pl.BlockSpec((TR, TL), lambda i, j: (i, j)),
        ),
        compiler_params=pltpu.CompilerParams(
            dimension_semantics=("parallel", "parallel"),
            vmem_limit_bytes=_VMEM_LIMIT,
        ),
    )(x2d, g_col)


def _scale_lanes(x2d: jax.Array, g_row: jax.Array) -> jax.Array:
    """Fallback path: x2d (N, C*HW), g_row (1, C*HW) f32 per-lane scale."""
    R, L = x2d.shape
    TR, TL = _pick_tiles(R, L, x2d.dtype.itemsize, per_lane_gamma=True)
    grid = (pl.cdiv(L, TL), pl.cdiv(R, TR))          # lanes outer -> gamma block
    return pl.pallas_call(                           # constant over inner row loop
        _scale_kernel,
        out_shape=jax.ShapeDtypeStruct((R, L), x2d.dtype),
        grid_spec=pltpu.PrefetchScalarGridSpec(
            num_scalar_prefetch=0,
            grid=grid,
            in_specs=[
                pl.BlockSpec((TR, TL), lambda j, i: (i, j)),
                pl.BlockSpec((1, TL), lambda j, i: (0, j)),
            ],
            out_specs=pl.BlockSpec((TR, TL), lambda j, i: (i, j)),
        ),
        compiler_params=pltpu.CompilerParams(
            dimension_semantics=("parallel", "parallel"),
            vmem_limit_bytes=_VMEM_LIMIT,
        ),
    )(x2d, g_row)


@jax.jit
def layer_scale_2d(x: jax.Array, gamma: jax.Array, gamma_lane_row=None) -> jax.Array:
    """out = x * gamma.  x: (N, C, H, W); gamma: any shape holding C scales.

    gamma_lane_row: optional pre-expanded (1, C*H*W) f32 row for the fallback
    path (avoids re-materializing it in HBM every call)."""
    N, C, H, W = x.shape
    HW = H * W
    g = gamma.reshape(-1).astype(jnp.float32)        # (C,)

    if HW % _LANE == 0:
        # Per-row gamma: row r of the (N*C, HW) view uses gamma[r % C].
        x2d = x.reshape(N * C, HW)
        g_col = jnp.broadcast_to(g[None, :, None], (N, C, 1)).reshape(N * C, 1)
        out = _scale_rows(x2d, g_col)
    else:
        # Lane-major fallback: keep the long contiguous axis on lanes.
        x2d = x.reshape(N, C * HW)
        if gamma_lane_row is None:
            gamma_lane_row = jnp.repeat(g, HW).reshape(1, C * HW)
        out = _scale_lanes(x2d, gamma_lane_row)

    return out.reshape(N, C, H, W)


class LayerScale2d:
    """JAX mirror of the PyTorch module (inplace has no meaning in functional JAX)."""

    def __init__(self, dim: int, init_values: float = 1e-05, inplace: bool = False):
        self.inplace = inplace  # TODO(synk): functional JAX — no in-place mutation.
        self.gamma = init_values * jnp.ones((dim, 1, 1), dtype=jnp.float32)
        self._lane_row_cache = {}  # (H, W) -> pre-expanded (1, C*H*W) f32 gamma row

    def __call__(self, x: jax.Array) -> jax.Array:
        N, C, H, W = x.shape
        if (H * W) % _LANE == 0:
            return layer_scale_2d(x, self.gamma)
        # Fallback path: build the per-lane gamma row once per spatial shape,
        # outside the jitted forward (review item #1).
        key = (H, W)
        row = self._lane_row_cache.get(key)
        if row is None:
            row = jnp.repeat(
                self.gamma.reshape(-1).astype(jnp.float32), H * W
            ).reshape(1, C * H * W)
            self._lane_row_cache[key] = row
        return layer_scale_2d(x, self.gamma, row)


if __name__ == "__main__":
    key = jax.random.PRNGKey(0)

    # Primary path: HW = 256 (multiple of 128).
    N, C, H, W = 2, 4, 16, 16
    x = jax.random.normal(key, (N, C, H, W), dtype=jnp.float32)
    mod = LayerScale2d(dim=C, init_values=1e-05)
    out = jax.block_until_ready(mod(x))
    ref = x * mod.gamma[None, :, :, :]
    assert out.shape == x.shape and out.dtype == x.dtype
    assert jnp.allclose(out, ref, rtol=1e-6, atol=1e-6)

    # Fallback path: HW = 49 (not a multiple of 128).
    x2 = jax.random.normal(jax.random.PRNGKey(1), (2, 6, 7, 7), dtype=jnp.float32)
    mod2 = LayerScale2d(dim=6, init_values=1e-05)
    out2 = jax.block_until_ready(mod2(x2))
    ref2 = x2 * mod2.gamma[None, :, :, :]
    assert out2.shape == x2.shape and out2.dtype == x2.dtype
    assert jnp.allclose(out2, ref2, rtol=1e-6, atol=1e-6)

    print("KERNEL_OK")
</pallas_src>

<mosaic_0001>
module attributes {stable_mosaic.version = 11 : i64} {
  func.func @_scale_kernel(%arg0: i32, %arg1: i32, %arg2: memref<8x256xf32, #tpu.memory_space<vmem>>, %arg3: memref<8x1xf32, #tpu.memory_space<vmem>>, %arg4: memref<8x256xf32, #tpu.memory_space<vmem>>) attributes {dimension_semantics = [#tpu.dimension_semantics<parallel>, #tpu.dimension_semantics<parallel>], iteration_bounds = array<i64: 1, 1>, scalar_prefetch = 0 : i64, scratch_operands = 0 : i64, tpu.core_type = #tpu.core_type<tc>, window_params = [{transform_indices = @transform_0, window_bounds = array<i64: 8, 256>}, {transform_indices = @transform_1, window_bounds = array<i64: 8, 1>}, {transform_indices = @transform_2, window_bounds = array<i64: 8, 256>}]} {
    %c0 = arith.constant 0 : index
    %c0_0 = arith.constant 0 : index
    %0 = vector.load %arg2[%c0, %c0_0] : memref<8x256xf32, #tpu.memory_space<vmem>>, vector<8x256xf32>
    %c0_1 = arith.constant 0 : index
    %c0_2 = arith.constant 0 : index
    %1 = vector.load %arg3[%c0_1, %c0_2] : memref<8x1xf32, #tpu.memory_space<vmem>>, vector<8x1xf32>
    %2 = vector.broadcast %1 : vector<8x1xf32> to vector<8x256xf32>
    %3 = arith.mulf %0, %2 : vector<8x256xf32>
    %c0_3 = arith.constant 0 : index
    %c0_4 = arith.constant 0 : index
    %4 = vector.load %arg4[%c0_3, %c0_4] : memref<8x256xf32, #tpu.memory_space<vmem>>, vector<8x256xf32>
    tpu.vector_store %arg4[%c0_3, %c0_4], %3 {strides = array<i32>} : memref<8x256xf32, #tpu.memory_space<vmem>>, vector<8x256xf32>,
    return
  }
  func.func @transform_0(%arg0: i32, %arg1: i32) -> (i32, i32) {
    %c0_i32 = arith.constant 0 : i32
    return %arg0, %arg1 : i32, i32
  }
  func.func @transform_1(%arg0: i32, %arg1: i32) -> (i32, i32) {
    %c0_i32 = arith.constant 0 : i32
    %c0_i32_0 = arith.constant 0 : i32
    return %arg0, %c0_i32 : i32, i32
  }
  func.func @transform_2(%arg0: i32, %arg1: i32) -> (i32, i32) {
    %c0_i32 = arith.constant 0 : i32
    return %arg0, %arg1 : i32, i32
  }
}

</mosaic_0001>

<llo_original>
// kernel: layer_scale_2d.1
$region0: #{layer_scale_2d.1}
  #allocation0 [shape = 'u32[]', space=smem, size = 0x4, offset = 0x4, fixed_abs, tag = 'smem constant byte address 0x4 - core index']
  #allocation1 [shape = 'u32[144,128]{1,0:T(1,128)}', space=vmem, size = 0x12000, scoped, tag = 'internal scratch']
  %s0 = inlined_call_operand.vmem [shape: f32[8,256], index: 0, kind: input, shape index: {}]
  %s1 = inlined_call_operand.vmem [shape: f32[8,1], index: 1, kind: input, shape index: {}]
  %s2 = inlined_call_operand.vmem [shape: f32[8,256], index: 2, kind: output, shape index: {}]
  %s3 = sld [smem:[#allocation0]]
  $region18: #{layer_scale_2d.1} parent=0
    _
  %s5 = ssub.s32 1, %s3
  %s6 = scalar_select 0, %s5, %s3
  // Predicated region
  $region2: #{layer_scale_2d.1} parent=0 // pred_check
    _
  $region3: #{layer_scale_2d.1} parent=0 // pred_check_branch
    %8 = sbr.rel (0) target = $region5
  $region4: #{layer_scale_2d.1} parent=0 // pred_region
    _
  $region5: #{layer_scale_2d.1} parent=0 // pred_fallthru
    _
  // Predicated region
  $region6: #{layer_scale_2d.1} parent=0 // pred_check
    _
  $region7: #{layer_scale_2d.1} parent=0 // pred_check_branch
    %10 = sbr.rel (0) target = $region9
  $region8: #{layer_scale_2d.1} parent=0 // pred_region
    _
  $region9: #{layer_scale_2d.1} parent=0 // pred_fallthru
    _
  %v11 = vld [vmem:[%s0] sm:$0xff]
  %v12 = vld [vmem:[%s0 + $0x8] sm:$0xff]
  %v13 = vld [vmem:[%s1] sm:$0xff]
  %15 = vset.pattern.permute.xlu0 0
  %16 = vperm.xlu0 %15, %v13
  %v17 = vpop.permute.xlu0 %16
  %v19 = vmul.f32 %v11, %v17
  %v20 = vmul.f32 %v12, %v17
  %21 = vst [vmem:[%s2] sm:$0xff] %v19
  %22 = vst [vmem:[%s2 + $0x8] sm:$0xff] %v20
  // Predicated region
  $region10: #{layer_scale_2d.1} parent=0 // pred_check
    _
  $region11: #{layer_scale_2d.1} parent=0 // pred_check_branch
    %24 = sbr.rel (0) target = $region13
  $region12: #{layer_scale_2d.1} parent=0 // pred_region
    _
  $region13: #{layer_scale_2d.1} parent=0 // pred_fallthru
    _
  // Predicated region
  $region14: #{layer_scale_2d.1} parent=0 // pred_check
    _
  $region15: #{layer_scale_2d.1} parent=0 // pred_check_branch
    %26 = sbr.rel (0) target = $region17
  $region16: #{layer_scale_2d.1} parent=0 // pred_region
    _
  $region17: #{layer_scale_2d.1} parent=0 // pred_fallthru
    _

</llo_original>
